<compile_context>
chip_gen: v6e
topology: v6e:2x2x1
jax: 0.10.0
libtpu: 0.0.40
codegen_flags: <defaults>
</compile_context>

<pallas_src>
import functools

import jax
import jax.numpy as jnp
from jax.experimental import pallas as pl
from jax.experimental.pallas import tpu as pltpu

EPS_IN = 1e-5      # nn.InstanceNorm1d default eps
EPS_BN = 1e-5      # nn.BatchNorm1d default eps
EPS_NORM = 1e-12   # F.normalize default eps

C1, C2, C3 = 32, 32, 16     # conv channel counts from ConvKRegion.__init__
K2, K3 = 16, 8              # conv2 / conv3 kernel sizes


# ----------------------------------------------------------------------------
# Fused kernel: composed conv stack (one Toeplitz matmul) + maxpool +
# zeroing hack + Linear -> LeakyReLU -> Linear + L2-normalize + cosine gram.
# ----------------------------------------------------------------------------
def _fused_kernel(xt_ref, t_ref, bt_ref, wl1_ref, bl1_ref, wl2_ref, bl2_ref,
                  o_ref, *, pool, d4, roi):
    # conv1.BN1.conv2.BN2.conv3.BN3 composed into a single deep-K MXU matmul.
    h = jnp.dot(xt_ref[...], t_ref[...],
                preferred_element_type=jnp.float32) + bt_ref[...]      # (n, pool*d4)

    # MaxPool1d(pool): T columns are pool-major, so pooling is a `pool`-way
    # maximum of contiguous lane slices (each slice is position-major (j,c)).
    pooled = h[:, 0:d4]
    for p in range(1, pool):
        pooled = jnp.maximum(pooled, h[:, p * d4:(p + 1) * d4])        # (n, d4)

    # Data-dependent zeroing hack from the reference forward.
    # pooled[0, d4-1] is exactly torch's x[0, 0, -1] (last pooled position,
    # last channel) despite the flatten-order change.
    rv = pooled[0:1, d4 - 1:d4]
    eq = pooled == rv
    cnt = jnp.sum(eq.astype(jnp.float32), keepdims=True)               # (1, 1)
    f = jnp.where(jnp.logical_and(eq, cnt > float(roi)), 0.0, pooled)

    # Linear -> LeakyReLU(0.2) -> Linear.
    h1 = jnp.dot(f, wl1_ref[...],
                 preferred_element_type=jnp.float32) + bl1_ref[...]
    h1 = jnp.where(h1 >= 0, h1, 0.2 * h1)
    e = jnp.dot(h1, wl2_ref[...],
                preferred_element_type=jnp.float32) + bl2_ref[...]

    # F.normalize(p=2, dim=-1, eps=1e-12): x / max(||x||, eps)
    #   == x * rsqrt(max(||x||^2, eps^2))   (rsqrt goes to the EUP slot).
    ssq = jnp.sum(e * e, axis=-1, keepdims=True)
    en = e * jax.lax.rsqrt(jnp.maximum(ssq, EPS_NORM * EPS_NORM))

    # Full cosine-similarity gram over all b*d rows (per-batch blocks are
    # extracted in the wrapper).
    o_ref[...] = jnp.dot(en, en.T, preferred_element_type=jnp.float32)


def fused_forward(xt, params, *, pool, d4, roi):
    n, _ = xt.shape
    args = (xt, params["T"], params["bT"], params["wl1"], params["bl1"],
            params["wl2"], params["bl2"])

    def rep(a):
        nd = a.ndim
        return pl.BlockSpec(a.shape, lambda i, _nd=nd: (0,) * _nd)

    return pl.pallas_call(
        functools.partial(_fused_kernel, pool=pool, d4=d4, roi=roi),
        out_shape=jax.ShapeDtypeStruct((n, n), jnp.float32),
        grid=(1,),
        in_specs=[rep(a) for a in args],
        out_specs=pl.BlockSpec((n, n), lambda i: (0, 0)),
        compiler_params=pltpu.CompilerParams(dimension_semantics=("arbitrary",)),
    )(*args)


# ----------------------------------------------------------------------------
# Parameters (deterministic, synthetic), pre-folded into the fused layout.
# ----------------------------------------------------------------------------
def init_params(key, time_series, cfg):
    ks = cfg["window_size"]
    pool = cfg["pool_size"]
    emb = cfg["embedding_size"]
    t_len = time_series
    l1 = (t_len - ks) // 2 + 1
    l2 = l1 - K2 + 1
    l3 = l2 - K3 + 1
    l4 = l3 // pool
    d4 = C3 * l4

    keys = jax.random.split(key, 16)

    def nrm(k, shape, scale=0.1):
        return scale * jax.random.normal(k, shape, dtype=jnp.float32)

    # PyTorch-layout weights (Conv1d: (C_out, C_in, K); Linear: (out, in)).
    conv1_w = nrm(keys[0], (C1, 1, ks));   conv1_b = nrm(keys[1], (C1,))
    conv2_w = nrm(keys[2], (C2, C1, K2));  conv2_b = nrm(keys[3], (C2,))
    conv3_w = nrm(keys[4], (C3, C2, K3));  conv3_b = nrm(keys[5], (C3,))
    lin1_w = nrm(keys[6], (32, d4));       lin1_b = nrm(keys[7], (32,))
    lin2_w = nrm(keys[8], (emb, 32));      lin2_b = nrm(keys[9], (emb,))

    # eval-mode BatchNorm1d: default running stats, random affine params.
    def bn(kg, kb, c):
        gamma = 1.0 + 0.1 * jax.random.normal(kg, (c,), dtype=jnp.float32)
        beta = 0.1 * jax.random.normal(kb, (c,), dtype=jnp.float32)
        rmean = jnp.zeros((c,), jnp.float32)
        rvar = jnp.ones((c,), jnp.float32)
        s = gamma * jax.lax.rsqrt(rvar + EPS_BN)
        a = beta - rmean * s
        return s, a

    s1, a1 = bn(keys[10], keys[11], C1)
    s2, a2 = bn(keys[12], keys[13], C2)
    s3, a3 = bn(keys[14], keys[15], C3)

    # Fold conv bias + eval-mode BN into per-layer affine weights.
    w1f = conv1_w[:, 0, :].T * s1[None, :]                          # (ks, C1)
    c1f = conv1_b * s1 + a1                                         # (C1,)
    w2f = jnp.transpose(conv2_w, (2, 1, 0)) * s2[None, None, :]     # (K2, C1, C2)
    c2f = conv2_b * s2 + a2
    w3f = jnp.transpose(conv3_w, (2, 1, 0)) * s3[None, None, :]     # (K3, C2, C3)
    c3f = conv3_b * s3 + a3

    def apply_stack(rows):
        # rows: (m, t_len) -> (m, l3, C3).  Init-time only, plain jnp.
        cols1 = jnp.stack([rows[:, t::2][:, :l1] for t in range(ks)], axis=-1)
        h1 = jnp.einsum('mlt,tc->mlc', cols1, w1f) + c1f            # (m, l1, C1)
        win2 = jnp.stack([h1[:, t:t + l2, :] for t in range(K2)], axis=2)
        h2 = jnp.einsum('mjtc,tcd->mjd', win2, w2f) + c2f           # (m, l2, C2)
        win3 = jnp.stack([h2[:, t:t + l3, :] for t in range(K3)], axis=2)
        h3 = jnp.einsum('mjtc,tcd->mjd', win3, w3f) + c3f           # (m, l3, C3)
        return h3

    # Compose the (affine) conv stack: responses to the identity basis give
    # the effective Toeplitz matrix, the zero input gives the effective bias.
    hz = apply_stack(jnp.zeros((1, t_len), jnp.float32))            # (1, l3, C3)
    hb = apply_stack(jnp.eye(t_len, dtype=jnp.float32))             # (t_len, l3, C3)
    A = hb - hz                                                     # linear part
    bias = hz[0]                                                    # (l3, C3)

    # Reorder output columns pool-major: col = (p*l4 + j)*C3 + c, drop the
    # l3 - l4*pool tail positions that MaxPool1d discards.
    span = l4 * pool
    T = (A[:, :span, :].reshape(t_len, l4, pool, C3)
         .transpose(0, 2, 1, 3).reshape(t_len, pool * d4))
    bT = (bias[:span, :].reshape(l4, pool, C3)
          .transpose(1, 0, 2).reshape(1, pool * d4))

    # Permute Linear-1 rows from torch's channel-major flatten (c*l4 + j) to
    # the kernel's position-major flatten (j*C3 + c).
    wl1 = lin1_w.T.reshape(C3, l4, 32).transpose(1, 0, 2).reshape(d4, 32)

    return {
        "T": T, "bT": bT,
        "wl1": wl1, "bl1": lin1_b.reshape(1, 32),
        "wl2": lin2_w.T, "bl2": lin2_b.reshape(1, emb),
    }


# ----------------------------------------------------------------------------
# Full SeqenceModel forward.
# ----------------------------------------------------------------------------
def seqence_model_forward(x, params, cfg):
    b, t_len, d = x.shape
    ks = cfg["window_size"]
    pool = cfg["pool_size"]
    l1 = (t_len - ks) // 2 + 1
    l2 = l1 - K2 + 1
    l3 = l2 - K3 + 1
    l4 = l3 // pool
    d4 = C3 * l4
    n = b * d

    # nn.InstanceNorm1d(time_series): normalize each (batch, time) row over roi.
    mu = jnp.mean(x, axis=-1, keepdims=True)
    var = jnp.mean(jnp.square(x - mu), axis=-1, keepdims=True)
    xn = (x - mu) * jax.lax.rsqrt(var + EPS_IN)

    # transpose + view((b*d, T)) -> lane-dense (n, t_len) rows for the kernel.
    xt = jnp.transpose(xn, (0, 2, 1)).reshape(n, t_len)

    # Fused conv stack + maxpool + zeroing hack + MLP head + cosine gram.
    gram = fused_forward(xt, params, pool=pool, d4=d4, roi=d)           # (n, n)

    # per-batch upper-triangular (offset=1) extraction, torch.triu_indices order.
    iu0, iu1 = jnp.triu_indices(d, k=1)
    rows = jnp.arange(b)[:, None] * d + iu0[None, :]
    cols = jnp.arange(b)[:, None] * d + iu1[None, :]
    return gram[rows, cols]                                             # (b, d*(d-1)//2)


if __name__ == "__main__":
    # Small shapes consistent with the module: x is (batch, time_series, roi_num).
    model_config = {"embedding_size": 8, "window_size": 8, "pool_size": 4}
    batch, time_series, roi_num = 2, 128, 16

    key = jax.random.PRNGKey(0)
    kx, kp = jax.random.split(key)
    x = jax.random.normal(kx, (batch, time_series, roi_num), dtype=jnp.float32)
    params = init_params(kp, time_series, model_config)

    fwd = jax.jit(functools.partial(seqence_model_forward, cfg=model_config))
    out = jax.block_until_ready(fwd(x, params))
    assert out.shape == (batch, roi_num * (roi_num - 1) // 2), out.shape
    assert bool(jnp.all(jnp.isfinite(out)))
    print("KERNEL_OK")
</pallas_src>

<mosaic_0001>
module attributes {stable_mosaic.version = 11 : i64} {
  func.func private @main(%arg0: i32) attributes {dimension_semantics = [#tpu.dimension_semantics<core_parallel>], iteration_bounds = array<i64: 2>, tpu.core_type = #tpu.core_type<sc_scalar_subcore>, window_params = []} {
    return
  }
}

module attributes {stable_mosaic.version = 11 : i64} {
  func.func private @main(%arg0: i32) attributes {dimension_semantics = [#tpu.dimension_semantics<core_parallel>], iteration_bounds = array<i64: 2>, tpu.core_type = #tpu.core_type<sc_scalar_subcore>, window_params = []} {
    return
  }
}

module attributes {stable_mosaic.version = 11 : i64} {
  func.func @_fused_kernel(%arg0: i32, %arg1: memref<32x128xf32, #tpu.memory_space<vmem>>, %arg2: memref<128x576xf32, #tpu.memory_space<vmem>>, %arg3: memref<1x576xf32, #tpu.memory_space<vmem>>, %arg4: memref<144x32xf32, #tpu.memory_space<vmem>>, %arg5: memref<1x32xf32, #tpu.memory_space<vmem>>, %arg6: memref<32x8xf32, #tpu.memory_space<vmem>>, %arg7: memref<1x8xf32, #tpu.memory_space<vmem>>, %arg8: memref<32x32xf32, #tpu.memory_space<vmem>>) attributes {dimension_semantics = [#tpu.dimension_semantics<arbitrary>], iteration_bounds = array<i64: 1>, scalar_prefetch = 0 : i64, scratch_operands = 0 : i64, tpu.core_type = #tpu.core_type<tc>, window_params = [{pipeline_mode = #tpu.pipeline_mode<synchronous>, transform_indices = @transform_0, window_bounds = array<i64: 32, 128>}, {pipeline_mode = #tpu.pipeline_mode<synchronous>, transform_indices = @transform_1, window_bounds = array<i64: 128, 576>}, {pipeline_mode = #tpu.pipeline_mode<synchronous>, transform_indices = @transform_2, window_bounds = array<i64: 1, 576>}, {pipeline_mode = #tpu.pipeline_mode<synchronous>, transform_indices = @transform_3, window_bounds = array<i64: 144, 32>}, {pipeline_mode = #tpu.pipeline_mode<synchronous>, transform_indices = @transform_4, window_bounds = array<i64: 1, 32>}, {pipeline_mode = #tpu.pipeline_mode<synchronous>, transform_indices = @transform_5, window_bounds = array<i64: 32, 8>}, {pipeline_mode = #tpu.pipeline_mode<synchronous>, transform_indices = @transform_6, window_bounds = array<i64: 1, 8>}, {pipeline_mode = #tpu.pipeline_mode<synchronous>, transform_indices = @transform_7, window_bounds = array<i64: 32, 32>}]} {
    %c0 = arith.constant 0 : index
    %c0_0 = arith.constant 0 : index
    %0 = vector.load %arg1[%c0, %c0_0] : memref<32x128xf32, #tpu.memory_space<vmem>>, vector<32x128xf32>
    %c0_1 = arith.constant 0 : index
    %c0_2 = arith.constant 0 : index
    %1 = vector.load %arg2[%c0_1, %c0_2] : memref<128x576xf32, #tpu.memory_space<vmem>>, vector<128x576xf32>
    %cst = arith.constant dense<0.000000e+00> : vector<32x576xf32>
    %2 = tpu.matmul %0, %1, %cst {dimension_numbers = #tpu.dot_dimension_numbers<[1], [0], [0], [1], [0, 0, 1, 1], [], []>} : vector<32x128xf32>, vector<128x576xf32>, vector<32x576xf32> -> vector<32x576xf32>
    %c0_3 = arith.constant 0 : index
    %c0_4 = arith.constant 0 : index
    %3 = vector.load %arg3[%c0_3, %c0_4] : memref<1x576xf32, #tpu.memory_space<vmem>>, vector<1x576xf32>
    %4 = vector.broadcast %3 : vector<1x576xf32> to vector<32x576xf32>
    %5 = arith.addf %2, %4 : vector<32x576xf32>
    %6 = vector.extract_strided_slice %5 {offsets = [0, 0], sizes = [32, 144], strides = [1, 1]} : vector<32x576xf32> to vector<32x144xf32>
    %7 = vector.extract_strided_slice %5 {offsets = [0, 144], sizes = [32, 144], strides = [1, 1]} : vector<32x576xf32> to vector<32x144xf32>
    %8 = arith.maximumf %6, %7 : vector<32x144xf32>
    %9 = vector.extract_strided_slice %5 {offsets = [0, 288], sizes = [32, 144], strides = [1, 1]} : vector<32x576xf32> to vector<32x144xf32>
    %10 = arith.maximumf %8, %9 : vector<32x144xf32>
    %11 = vector.extract_strided_slice %5 {offsets = [0, 432], sizes = [32, 144], strides = [1, 1]} : vector<32x576xf32> to vector<32x144xf32>
    %12 = arith.maximumf %10, %11 : vector<32x144xf32>
    %13 = vector.extract_strided_slice %12 {offsets = [0, 143], sizes = [1, 1], strides = [1, 1]} : vector<32x144xf32> to vector<1x1xf32>
    %14 = vector.broadcast %13 : vector<1x1xf32> to vector<32x144xf32>
    %15 = arith.cmpf oeq, %12, %14 : vector<32x144xf32>
    %16 = arith.extui %15 : vector<32x144xi1> to vector<32x144xi32>
    %17 = arith.sitofp %16 : vector<32x144xi32> to vector<32x144xf32>
    %18 = vector.shape_cast %17 : vector<32x144xf32> to vector<1x32x144xf32>
    %cst_5 = arith.constant dense<0.000000e+00> : vector<1xf32>
    %19 = vector.multi_reduction <add>, %18, %cst_5 [1, 2] : vector<1x32x144xf32> to vector<1xf32>
    %20 = vector.shape_cast %19 : vector<1xf32> to vector<1x1x1xf32>
    %21 = vector.extract %20[0, 0, 0] : f32 from vector<1x1x1xf32>
    %22 = vector.broadcast %21 : f32 to vector<1x1xf32>
    %cst_6 = arith.constant 1.600000e+01 : f32
    %23 = vector.broadcast %cst_6 : f32 to vector<1x1xf32>
    %24 = arith.cmpf ogt, %22, %23 : vector<1x1xf32>
    %25 = vector.broadcast %24 : vector<1x1xi1> to vector<32x144xi1>
    %26 = arith.andi %15, %25 : vector<32x144xi1>
    %cst_7 = arith.constant 0.000000e+00 : f32
    %27 = vector.broadcast %cst_7 : f32 to vector<32x144xf32>
    %28 = arith.select %26, %27, %12 : vector<32x144xi1>, vector<32x144xf32>
    %c0_8 = arith.constant 0 : index
    %c0_9 = arith.constant 0 : index
    %29 = vector.load %arg4[%c0_8, %c0_9] : memref<144x32xf32, #tpu.memory_space<vmem>>, vector<144x32xf32>
    %cst_10 = arith.constant dense<0.000000e+00> : vector<32x32xf32>
    %30 = tpu.matmul %28, %29, %cst_10 {dimension_numbers = #tpu.dot_dimension_numbers<[1], [0], [0], [1], [0, 0, 1, 1], [], []>} : vector<32x144xf32>, vector<144x32xf32>, vector<32x32xf32> -> vector<32x32xf32>
    %c0_11 = arith.constant 0 : index
    %c0_12 = arith.constant 0 : index
    %31 = vector.load %arg5[%c0_11, %c0_12] : memref<1x32xf32, #tpu.memory_space<vmem>>, vector<1x32xf32>
    %32 = vector.broadcast %31 : vector<1x32xf32> to vector<32x32xf32>
    %33 = arith.addf %30, %32 : vector<32x32xf32>
    %cst_13 = arith.constant 0.000000e+00 : f32
    %34 = vector.broadcast %cst_13 : f32 to vector<32x32xf32>
    %35 = arith.cmpf oge, %33, %34 : vector<32x32xf32>
    %cst_14 = arith.constant 2.000000e-01 : f32
    %36 = vector.broadcast %cst_14 : f32 to vector<32x32xf32>
    %37 = arith.mulf %36, %33 : vector<32x32xf32>
    %38 = arith.select %35, %33, %37 : vector<32x32xi1>, vector<32x32xf32>
    %c0_15 = arith.constant 0 : index
    %c0_16 = arith.constant 0 : index
    %39 = vector.load %arg6[%c0_15, %c0_16] : memref<32x8xf32, #tpu.memory_space<vmem>>, vector<32x8xf32>
    %cst_17 = arith.constant dense<0.000000e+00> : vector<32x8xf32>
    %40 = tpu.matmul %38, %39, %cst_17 {dimension_numbers = #tpu.dot_dimension_numbers<[1], [0], [0], [1], [0, 0, 1, 1], [], []>} : vector<32x32xf32>, vector<32x8xf32>, vector<32x8xf32> -> vector<32x8xf32>
    %c0_18 = arith.constant 0 : index
    %c0_19 = arith.constant 0 : index
    %41 = vector.load %arg7[%c0_18, %c0_19] : memref<1x8xf32, #tpu.memory_space<vmem>>, vector<1x8xf32>
    %42 = vector.broadcast %41 : vector<1x8xf32> to vector<32x8xf32>
    %43 = arith.addf %40, %42 : vector<32x8xf32>
    %44 = arith.mulf %43, %43 : vector<32x8xf32>
    %cst_20 = arith.constant dense<0.000000e+00> : vector<32xf32>
    %45 = vector.multi_reduction <add>, %44, %cst_20 [1] : vector<32x8xf32> to vector<32xf32>
    %46 = vector.shape_cast %45 : vector<32xf32> to vector<32x1xf32>
    %cst_21 = arith.constant 1.000000e-24 : f32
    %47 = vector.broadcast %cst_21 : f32 to vector<32x1xf32>
    %48 = arith.maximumf %46, %47 : vector<32x1xf32>
    %49 = math.rsqrt %48 : vector<32x1xf32>
    %50 = vector.broadcast %49 : vector<32x1xf32> to vector<32x8xf32>
    %51 = arith.mulf %43, %50 : vector<32x8xf32>
    %52 = tpu.transpose %51, [1, 0] : vector<32x8xf32> -> vector<8x32xf32>
    %cst_22 = arith.constant dense<0.000000e+00> : vector<32x32xf32>
    %53 = tpu.matmul %51, %52, %cst_22 {dimension_numbers = #tpu.dot_dimension_numbers<[1], [0], [0], [1], [0, 0, 1, 1], [], []>} : vector<32x8xf32>, vector<8x32xf32>, vector<32x32xf32> -> vector<32x32xf32>
    %c0_23 = arith.constant 0 : index
    %c0_24 = arith.constant 0 : index
    %54 = vector.load %arg8[%c0_23, %c0_24] : memref<32x32xf32, #tpu.memory_space<vmem>>, vector<32x32xf32>
    tpu.vector_store %arg8[%c0_23, %c0_24], %53 {strides = array<i32>} : memref<32x32xf32, #tpu.memory_space<vmem>>, vector<32x32xf32>,
    return
  }
  func.func @transform_0(%arg0: i32) -> (i32, i32) {
    %c0_i32 = arith.constant 0 : i32
    %c0_i32_0 = arith.constant 0 : i32
    %c0_i32_1 = arith.constant 0 : i32
    return %c0_i32, %c0_i32_0 : i32, i32
  }
  func.func @transform_1(%arg0: i32) -> (i32, i32) {
    %c0_i32 = arith.constant 0 : i32
    %c0_i32_0 = arith.constant 0 : i32
    %c0_i32_1 = arith.constant 0 : i32
    return %c0_i32, %c0_i32_0 : i32, i32
  }
  func.func @transform_2(%arg0: i32) -> (i32, i32) {
    %c0_i32 = arith.constant 0 : i32
    %c0_i32_0 = arith.constant 0 : i32
    %c0_i32_1 = arith.constant 0 : i32
    return %c0_i32, %c0_i32_0 : i32, i32
  }
  func.func @transform_3(%arg0: i32) -> (i32, i32) {
    %c0_i32 = arith.constant 0 : i32
    %c0_i32_0 = arith.constant 0 : i32
    %c0_i32_1 = arith.constant 0 : i32
    return %c0_i32, %c0_i32_0 : i32, i32
  }
  func.func @transform_4(%arg0: i32) -> (i32, i32) {
    %c0_i32 = arith.constant 0 : i32
    %c0_i32_0 = arith.constant 0 : i32
    %c0_i32_1 = arith.constant 0 : i32
    return %c0_i32, %c0_i32_0 : i32, i32
  }
  func.func @transform_5(%arg0: i32) -> (i32, i32) {
    %c0_i32 = arith.constant 0 : i32
    %c0_i32_0 = arith.constant 0 : i32
    %c0_i32_1 = arith.constant 0 : i32
    return %c0_i32, %c0_i32_0 : i32, i32
  }
  func.func @transform_6(%arg0: i32) -> (i32, i32) {
    %c0_i32 = arith.constant 0 : i32
    %c0_i32_0 = arith.constant 0 : i32
    %c0_i32_1 = arith.constant 0 : i32
    return %c0_i32, %c0_i32_0 : i32, i32
  }
  func.func @transform_7(%arg0: i32) -> (i32, i32) {
    %c0_i32 = arith.constant 0 : i32
    %c0_i32_0 = arith.constant 0 : i32
    %c0_i32_1 = arith.constant 0 : i32
    return %c0_i32, %c0_i32_0 : i32, i32
  }
}

</mosaic_0001>

<llo_original>
// kernel: seqence_model_forward.1
$region0: #{seqence_model_forward.1}
  #allocation0 [shape = 'u32[]', space=smem, size = 0x4, offset = 0x4, fixed_abs, tag = 'smem constant byte address 0x4 - core index']
  #allocation1 [shape = 'u32[144,128]{1,0:T(1,128)}', space=vmem, size = 0x12000, scoped, tag = 'internal scratch']
  %s0 = inlined_call_operand.vmem [shape: f32[32,128], index: 0, kind: input, shape index: {}]
  %s1 = inlined_call_operand.vmem [shape: f32[128,576], index: 1, kind: input, shape index: {}]
  %s2 = inlined_call_operand.vmem [shape: f32[1,576], index: 2, kind: input, shape index: {}]
  %s3 = inlined_call_operand.vmem [shape: f32[144,32], index: 3, kind: input, shape index: {}]
  %s4 = inlined_call_operand.vmem [shape: f32[1,32], index: 4, kind: input, shape index: {}]
  %s5 = inlined_call_operand.vmem [shape: f32[32,8], index: 5, kind: input, shape index: {}]
  %s6 = inlined_call_operand.vmem [shape: f32[1,8], index: 6, kind: input, shape index: {}]
  %s7 = inlined_call_operand.vmem [shape: f32[32,32], index: 7, kind: output, shape index: {}]
  %s8 = sld [smem:[#allocation0]]
  $region38: #{seqence_model_forward.1} parent=0
    _
  %s10 = ssub.s32 1, %s8
  %s11 = scalar_select 0, %s10, %s8
  // Predicated region
  $region2: #{seqence_model_forward.1} parent=0 // pred_check
    _
  $region3: #{seqence_model_forward.1} parent=0 // pred_check_branch
    %13 = sbr.rel (0) target = $region5
  $region4: #{seqence_model_forward.1} parent=0 // pred_region
    _
  $region5: #{seqence_model_forward.1} parent=0 // pred_fallthru
    _
  // Predicated region
  $region6: #{seqence_model_forward.1} parent=0 // pred_check
    _
  $region7: #{seqence_model_forward.1} parent=0 // pred_check_branch
    %15 = sbr.rel (0) target = $region9
  $region8: #{seqence_model_forward.1} parent=0 // pred_region
    _
  $region9: #{seqence_model_forward.1} parent=0 // pred_fallthru
    _
  // Predicated region
  $region10: #{seqence_model_forward.1} parent=0 // pred_check
    _
  $region11: #{seqence_model_forward.1} parent=0 // pred_check_branch
    %17 = sbr.rel (0) target = $region13
  $region12: #{seqence_model_forward.1} parent=0 // pred_region
    _
  $region13: #{seqence_model_forward.1} parent=0 // pred_fallthru
    _
  // Predicated region
  $region14: #{seqence_model_forward.1} parent=0 // pred_check
    _
  $region15: #{seqence_model_forward.1} parent=0 // pred_check_branch
    %19 = sbr.rel (0) target = $region17
  $region16: #{seqence_model_forward.1} parent=0 // pred_region
    _
  $region17: #{seqence_model_forward.1} parent=0 // pred_fallthru
    _
  // Predicated region
  $region18: #{seqence_model_forward.1} parent=0 // pred_check
    _
  $region19: #{seqence_model_forward.1} parent=0 // pred_check_branch
    %21 = sbr.rel (0) target = $region21
  $region20: #{seqence_model_forward.1} parent=0 // pred_region
    _
  $region21: #{seqence_model_forward.1} parent=0 // pred_fallthru
    _
  // Predicated region
  $region22: #{seqence_model_forward.1} parent=0 // pred_check
    _
  $region23: #{seqence_model_forward.1} parent=0 // pred_check_branch
    %23 = sbr.rel (0) target = $region25
  $region24: #{seqence_model_forward.1} parent=0 // pred_region
    _
  $region25: #{seqence_model_forward.1} parent=0 // pred_fallthru
    _
  // Predicated region
  $region26: #{seqence_model_forward.1} parent=0 // pred_check
    _
  $region27: #{seqence_model_forward.1} parent=0 // pred_check_branch
    %25 = sbr.rel (0) target = $region29
  $region28: #{seqence_model_forward.1} parent=0 // pred_region
    _
  $region29: #{seqence_model_forward.1} parent=0 // pred_fallthru
    _
  %v26 = vld [vmem:[%s0] sm:$0xff]
  %v27 = vld [vmem:[%s0 + $0x8] sm:$0xff]
  %v28 = vld [vmem:[%s0 + $0x10] sm:$0xff]
  %v29 = vld [vmem:[%s0 + $0x18] sm:$0xff]
  %v30 = vld [vmem:[%s1] sm:$0xff]
  %v31 = vld [vmem:[%s1 + $0x8] sm:$0xff]
  %v32 = vld [vmem:[%s1 + $0x10] sm:$0xff]
  %v33 = vld [vmem:[%s1 + $0x18] sm:$0xff]
  %v34 = vld [vmem:[%s1 + $0x20] sm:$0xff]
  %v35 = vld [vmem:[%s1 + $0x28] sm:$0xff]
  %v36 = vld [vmem:[%s1 + $0x30] sm:$0xff]
  %v37 = vld [vmem:[%s1 + $0x38] sm:$0xff]
  %v38 = vld [vmem:[%s1 + $0x40] sm:$0xff]
  %v39 = vld [vmem:[%s1 + $0x48] sm:$0xff]
  %v40 = vld [vmem:[%s1 + $0x50] sm:$0xff]
  %v41 = vld [vmem:[%s1 + $0x58] sm:$0xff]
  %v42 = vld [vmem:[%s1 + $0x60] sm:$0xff]
  %v43 = vld [vmem:[%s1 + $0x68] sm:$0xff]
  %v44 = vld [vmem:[%s1 + $0x70] sm:$0xff]
  %v45 = vld [vmem:[%s1 + $0x78] sm:$0xff]
  %v46 = vld [vmem:[%s1 + $0x80] sm:$0xff]
  %v47 = vld [vmem:[%s1 + $0x88] sm:$0xff]
  %v48 = vld [vmem:[%s1 + $0x90] sm:$0xff]
  %v49 = vld [vmem:[%s1 + $0x98] sm:$0xff]
  %v50 = vld [vmem:[%s1 + $0xa0] sm:$0xff]
  %v51 = vld [vmem:[%s1 + $0xa8] sm:$0xff]
  %v52 = vld [vmem:[%s1 + $0xb0] sm:$0xff]
  %v53 = vld [vmem:[%s1 + $0xb8] sm:$0xff]
  %v54 = vld [vmem:[%s1 + $0xc0] sm:$0xff]
  %v55 = vld [vmem:[%s1 + $0xc8] sm:$0xff]
  %v56 = vld [vmem:[%s1 + $0xd0] sm:$0xff]
  %v57 = vld [vmem:[%s1 + $0xd8] sm:$0xff]
  %v58 = vld [vmem:[%s1 + $0xe0] sm:$0xff]
  %v59 = vld [vmem:[%s1 + $0xe8] sm:$0xff]
  %v60 = vld [vmem:[%s1 + $0xf0] sm:$0xff]
  %v61 = vld [vmem:[%s1 + $0xf8] sm:$0xff]
  %v62 = vld [vmem:[%s1 + $0x100] sm:$0xff]
  %v63 = vld [vmem:[%s1 + $0x108] sm:$0xff]
  %v64 = vld [vmem:[%s1 + $0x110] sm:$0xff]
  %v65 = vld [vmem:[%s1 + $0x118] sm:$0xff]
  %v66 = vld [vmem:[%s1 + $0x120] sm:$0xff]
  %v67 = vld [vmem:[%s1 + $0x128] sm:$0xff]
  %v68 = vld [vmem:[%s1 + $0x130] sm:$0xff]
  %v69 = vld [vmem:[%s1 + $0x138] sm:$0xff]
  %v70 = vld [vmem:[%s1 + $0x140] sm:$0xff]
  %v71 = vld [vmem:[%s1 + $0x148] sm:$0xff]
  %v72 = vld [vmem:[%s1 + $0x150] sm:$0xff]
  %v73 = vld [vmem:[%s1 + $0x158] sm:$0xff]
  %v74 = vld [vmem:[%s1 + $0x160] sm:$0xff]
  %v75 = vld [vmem:[%s1 + $0x168] sm:$0xff]
  %v76 = vld [vmem:[%s1 + $0x170] sm:$0xff]
  %v77 = vld [vmem:[%s1 + $0x178] sm:$0xff]
  %v78 = vld [vmem:[%s1 + $0x180] sm:$0xff]
  %v79 = vld [vmem:[%s1 + $0x188] sm:$0xff]
  %v80 = vld [vmem:[%s1 + $0x190] sm:$0xff]
  %v81 = vld [vmem:[%s1 + $0x198] sm:$0xff]
  %v82 = vld [vmem:[%s1 + $0x1a0] sm:$0xff]
  %v83 = vld [vmem:[%s1 + $0x1a8] sm:$0xff]
  %v84 = vld [vmem:[%s1 + $0x1b0] sm:$0xff]
  %v85 = vld [vmem:[%s1 + $0x1b8] sm:$0xff]
  %v86 = vld [vmem:[%s1 + $0x1c0] sm:$0xff]
  %v87 = vld [vmem:[%s1 + $0x1c8] sm:$0xff]
  %v88 = vld [vmem:[%s1 + $0x1d0] sm:$0xff]
  %v89 = vld [vmem:[%s1 + $0x1d8] sm:$0xff]
  %v90 = vld [vmem:[%s1 + $0x1e0] sm:$0xff]
  %v91 = vld [vmem:[%s1 + $0x1e8] sm:$0xff]
  %v92 = vld [vmem:[%s1 + $0x1f0] sm:$0xff]
  %v93 = vld [vmem:[%s1 + $0x1f8] sm:$0xff]
  %v94 = vld [vmem:[%s1 + $0x200] sm:$0xff]
  %v95 = vld [vmem:[%s1 + $0x208] sm:$0xff]
  %v96 = vld [vmem:[%s1 + $0x210] sm:$0xff]
  %v97 = vld [vmem:[%s1 + $0x218] sm:$0xff]
  %v98 = vld [vmem:[%s1 + $0x220] sm:$0xff]
  %v99 = vld [vmem:[%s1 + $0x228] sm:$0xff]
  %v100 = vld [vmem:[%s1 + $0x230] sm:$0xff]
  %v101 = vld [vmem:[%s1 + $0x238] sm:$0xff]
  %v102 = vld [vmem:[%s1 + $0x240] sm:$0xff]
  %v103 = vld [vmem:[%s1 + $0x248] sm:$0xff]
  %v104 = vld [vmem:[%s1 + $0x250] sm:$0xff]
  %v105 = vld [vmem:[%s1 + $0x258] sm:$0xff]
  %v106 = vld [vmem:[%s1 + $0x260] sm:$0xff]
  %v107 = vld [vmem:[%s1 + $0x268] sm:$0xff]
  %v108 = vld [vmem:[%s1 + $0x270] sm:$0xff]
  %v109 = vld [vmem:[%s1 + $0x278] sm:$0xff]
  %v110 = vld [vmem:[%s2] sm:$0x1f]
  %v112 = vlaneseq
  %v113 = vshrl.u32 %v112, 7
  %v114 = vsub.s32 0, %v113
  %v115 = vrot.slane %v110, %v114
  %v116 = vlaneseq
  %v117 = vshrl.u32 %v116, 7
  %v118 = vsub.s32 1, %v117
  %v119 = vrot.slane %v110, %v118
  %v120 = vlaneseq
  %v121 = vshrl.u32 %v120, 7
  %v122 = vsub.s32 2, %v121
  %v123 = vrot.slane %v110, %v122
  %v124 = vlaneseq
  %v125 = vshrl.u32 %v124, 7
  %v126 = vsub.s32 3, %v125
  %v127 = vrot.slane %v110, %v126
  %v128 = vlaneseq
  %v129 = vshrl.u32 %v128, 7
  %v130 = vsub.s32 4, %v129
  %v131 = vrot.slane %v110, %v130
  %137 = vmatprep.subr.mxu0 %v106
  %138 = vmatpush1.msra.mxu0 %v105
  %139 = vmatprep.subr.mxu0 %v101
  %140 = vmatpush1.msra.mxu0 %v100
  %141 = vmatprep.subr.mxu0 %v96
  %142 = vmatpush1.msra.mxu0 %v95
  %143 = vmatprep.subr.mxu0 %v91
  %144 = vmatpush1.msra.mxu0 %v90
  %145 = vmatprep.subr.mxu0 %v86
  %146 = vmatpush1.msra.mxu0 %v85
  %147 = vmatprep.subr.mxu0 %v81
  %148 = vmatpush1.msra.mxu0 %v80
  %149 = vmatprep.subr.mxu0 %v76
  %150 = vmatpush1.msra.mxu0 %v75
  %151 = vmatprep.subr.mxu0 %v71
  %152 = vmatpush1.msra.mxu0 %v70
  %153 = vmatprep.subr.mxu0 %v66
  %154 = vmatpush1.msra.mxu0 %v65
  %155 = vmatprep.subr.mxu0 %v61
  %156 = vmatpush1.msra.mxu0 %v60
  %157 = vmatprep.subr.mxu0 %v56
  %158 = vmatpush1.msra.mxu0 %v55
  %159 = vmatprep.subr.mxu0 %v51
  %160 = vmatpush1.msra.mxu0 %v50
  %161 = vmatprep.subr.mxu0 %v46
  %162 = vmatpush1.msra.mxu0 %v45
  %163 = vmatprep.subr.mxu0 %v41
  %164 = vmatpush1.msra.mxu0 %v40
  %165 = vmatprep.subr.mxu0 %v36
  %166 = vmatpush1.msra.mxu0 %v35
  %167 = vmatprep.subr.mxu0 %v31
  %168 = vmatpush1.msra.mxu0 %v30
  %169 = vmatprep.subr.mxu0 0.0
  %170 = vmatpush2.msra.mxu0 0.0
  %171 = vmatprep.subr.mxu0 0.0
  %172 = vmatpush2.msra.mxu0 0.0
  %173 = vmatprep.subr.mxu0 0.0
  %174 = vmatpush2.msra.mxu0 0.0
  %175 = vmatprep.subr.mxu0 0.0
  %176 = vmatpush2.msra.mxu0 0.0
  %177 = vmatprep.subr.mxu0 0.0
  %178 = vmatpush2.msra.mxu0 0.0
  %179 = vmatprep.subr.mxu0 0.0
  %180 = vmatpush2.msra.mxu0 0.0
  %181 = vmatprep.subr.mxu0 0.0
  %182 = vmatpush2.msra.mxu0 0.0
  %183 = vmatprep.subr.mxu0 0.0
  %184 = vmatpush2.msra.mxu0 0.0
  %185 = vmatprep.subr.mxu0 0.0
  %186 = vmatpush2.msra.mxu0 0.0
  %187 = vmatprep.subr.mxu0 0.0
  %188 = vmatpush2.msra.mxu0 0.0
  %189 = vmatprep.subr.mxu0 0.0
  %190 = vmatpush2.msra.mxu0 0.0
  %191 = vmatprep.subr.mxu0 0.0
  %192 = vmatpush2.msra.mxu0 0.0
  %193 = vmatprep.subr.mxu0 0.0
  %194 = vmatpush2.msra.mxu0 0.0
  %195 = vmatprep.subr.mxu0 0.0
  %196 = vmatpush2.msra.mxu0 0.0
  %197 = vmatprep.subr.mxu0 0.0
  %198 = vmatpush2.msra.mxu0 0.0
  %199 = vmatprep.subr.mxu0 0.0
  %200 = vmatpush2.msra.mxu0 0.0
  %201 = vmatprep.mubr.f32.mxu0 0.0
  %202 = vmatmul.mubr.f32.gmra.mxu0 %v26
  %v203 = vpop.f32.mrf.mxu0
  %v204 = vadd.f32 %v115, %v203
  %v205 = vpop.f32.mrf.mxu0
  %v206 = vadd.f32 %v119, %v205
  %207 = vmatprep.mubr.f32.mxu0 0.0
  %208 = vmatmul.mubr.f32.gmra.mxu0 %v27
  %v209 = vpop.f32.mrf.mxu0
  %v210 = vadd.f32 %v115, %v209
  %v211 = vpop.f32.mrf.mxu0
  %v212 = vadd.f32 %v119, %v211
  %213 = vmatprep.mubr.f32.mxu0 0.0
  %214 = vmatmul.mubr.f32.gmra.mxu0 %v28
  %v215 = vpop.f32.mrf.mxu0
  %v216 = vadd.f32 %v115, %v215
  %v217 = vpop.f32.mrf.mxu0
  %v218 = vadd.f32 %v119, %v217
  %219 = vmatprep.mubr.f32.mxu0 0.0
  %220 = vmatmul.mubr.f32.gmra.mxu0 %v29
  %v221 = vpop.f32.mrf.mxu0
  %v222 = vadd.f32 %v115, %v221
  %v223 = vpop.f32.mrf.mxu0
  %v224 = vadd.f32 %v119, %v223
  %225 = vdwg.mxu0
  %226 = vmatprep.subr.mxu0 %v108
  %227 = vmatpush1.msra.mxu0 %v107
  %228 = vmatprep.subr.mxu0 %v103
  %229 = vmatpush1.msra.mxu0 %v102
  %230 = vmatprep.subr.mxu0 %v98
  %231 = vmatpush1.msra.mxu0 %v97
  %232 = vmatprep.subr.mxu0 %v93
  %233 = vmatpush1.msra.mxu0 %v92
  %234 = vmatprep.subr.mxu0 %v88
  %235 = vmatpush1.msra.mxu0 %v87
  %236 = vmatprep.subr.mxu0 %v83
  %237 = vmatpush1.msra.mxu0 %v82
  %238 = vmatprep.subr.mxu0 %v78
  %239 = vmatpush1.msra.mxu0 %v77
  %240 = vmatprep.subr.mxu0 %v73
  %241 = vmatpush1.msra.mxu0 %v72
  %242 = vmatprep.subr.mxu0 %v68
  %243 = vmatpush1.msra.mxu0 %v67
  %244 = vmatprep.subr.mxu0 %v63
  %245 = vmatpush1.msra.mxu0 %v62
  %246 = vmatprep.subr.mxu0 %v58
  %247 = vmatpush1.msra.mxu0 %v57
  %248 = vmatprep.subr.mxu0 %v53
  %249 = vmatpush1.msra.mxu0 %v52
  %250 = vmatprep.subr.mxu0 %v48
  %251 = vmatpush1.msra.mxu0 %v47
  %252 = vmatprep.subr.mxu0 %v43
  %253 = vmatpush1.msra.mxu0 %v42
  %254 = vmatprep.subr.mxu0 %v38
  %255 = vmatpush1.msra.mxu0 %v37
  %256 = vmatprep.subr.mxu0 %v33
  %257 = vmatpush1.msra.mxu0 %v32
  %258 = vmatprep.subr.mxu0 0.0
  %259 = vmatpush2.msra.mxu0 0.0
  %260 = vmatprep.subr.mxu0 0.0
  %261 = vmatpush2.msra.mxu0 0.0
  %262 = vmatprep.subr.mxu0 0.0
  %263 = vmatpush2.msra.mxu0 0.0
  %264 = vmatprep.subr.mxu0 0.0
  %265 = vmatpush2.msra.mxu0 0.0
  %266 = vmatprep.subr.mxu0 0.0
  %267 = vmatpush2.msra.mxu0 0.0
  %268 = vmatprep.subr.mxu0 0.0
  %269 = vmatpush2.msra.mxu0 0.0
  %270 = vmatprep.subr.mxu0 0.0
  %271 = vmatpush2.msra.mxu0 0.0
  %272 = vmatprep.subr.mxu0 0.0
  %273 = vmatpush2.msra.mxu0 0.0
  %274 = vmatprep.subr.mxu0 0.0
  %275 = vmatpush2.msra.mxu0 0.0
  %276 = vmatprep.subr.mxu0 0.0
  %277 = vmatpush2.msra.mxu0 0.0
  %278 = vmatprep.subr.mxu0 0.0
  %279 = vmatpush2.msra.mxu0 0.0
  %280 = vmatprep.subr.mxu0 0.0
  %281 = vmatpush2.msra.mxu0 0.0
  %282 = vmatprep.subr.mxu0 0.0
  %283 = vmatpush2.msra.mxu0 0.0
  %284 = vmatprep.subr.mxu0 0.0
  %285 = vmatpush2.msra.mxu0 0.0
  %286 = vmatprep.subr.mxu0 0.0
  %287 = vmatpush2.msra.mxu0 0.0
  %288 = vmatprep.subr.mxu0 0.0
  %289 = vmatpush2.msra.mxu0 0.0
  %290 = vmatprep.mubr.f32.mxu0 0.0
  %291 = vmatmul.mubr.f32.gmra.mxu0 %v26
  %v292 = vpop.f32.mrf.mxu0
  %v293 = vadd.f32 %v123, %v292
  %v294 = vpop.f32.mrf.mxu0
  %v295 = vadd.f32 %v127, %v294
  %296 = vmatprep.mubr.f32.mxu0 0.0
  %297 = vmatmul.mubr.f32.gmra.mxu0 %v27
  %v298 = vpop.f32.mrf.mxu0
  %v299 = vadd.f32 %v123, %v298
  %v300 = vpop.f32.mrf.mxu0
  %v301 = vadd.f32 %v127, %v300
  %302 = vmatprep.mubr.f32.mxu0 0.0
  %303 = vmatmul.mubr.f32.gmra.mxu0 %v28
  %v304 = vpop.f32.mrf.mxu0
  %v305 = vadd.f32 %v123, %v304
  %v306 = vpop.f32.mrf.mxu0
  %v307 = vadd.f32 %v127, %v306
  %308 = vmatprep.mubr.f32.mxu0 0.0
  %309 = vmatmul.mubr.f32.gmra.mxu0 %v29
  %v310 = vpop.f32.mrf.mxu0
  %v311 = vadd.f32 %v123, %v310
  %v312 = vpop.f32.mrf.mxu0
  %v313 = vadd.f32 %v127, %v312
  %314 = vdwg.mxu0
  %315 = vmatprep.subr.mxu0 0.0
  %316 = vmatpush1.msra.mxu0 %v109
  %317 = vmatprep.subr.mxu0 0.0
  %318 = vmatpush1.msra.mxu0 %v104
  %319 = vmatprep.subr.mxu0 0.0
  %320 = vmatpush1.msra.mxu0 %v99
  %321 = vmatprep.subr.mxu0 0.0
  %322 = vmatpush1.msra.mxu0 %v94
  %323 = vmatprep.subr.mxu0 0.0
  %324 = vmatpush1.msra.mxu0 %v89
  %325 = vmatprep.subr.mxu0 0.0
  %326 = vmatpush1.msra.mxu0 %v84
  %327 = vmatprep.subr.mxu0 0.0
  %328 = vmatpush1.msra.mxu0 %v79
  %329 = vmatprep.subr.mxu0 0.0
  %330 = vmatpush1.msra.mxu0 %v74
  %331 = vmatprep.subr.mxu0 0.0
  %332 = vmatpush1.msra.mxu0 %v69
  %333 = vmatprep.subr.mxu0 0.0
  %334 = vmatpush1.msra.mxu0 %v64
  %335 = vmatprep.subr.mxu0 0.0
  %336 = vmatpush1.msra.mxu0 %v59
  %337 = vmatprep.subr.mxu0 0.0
  %338 = vmatpush1.msra.mxu0 %v54
  %339 = vmatprep.subr.mxu0 0.0
  %340 = vmatpush1.msra.mxu0 %v49
  %341 = vmatprep.subr.mxu0 0.0
  %342 = vmatpush1.msra.mxu0 %v44
  %343 = vmatprep.subr.mxu0 0.0
  %344 = vmatpush1.msra.mxu0 %v39
  %345 = vmatprep.subr.mxu0 0.0
  %346 = vmatpush1.msra.mxu0 %v34
  %347 = vmatprep.subr.mxu0 0.0
  %348 = vmatpush2.msra.mxu0 0.0
  %349 = vmatprep.subr.mxu0 0.0
  %350 = vmatpush2.msra.mxu0 0.0
  %351 = vmatprep.subr.mxu0 0.0
  %352 = vmatpush2.msra.mxu0 0.0
  %353 = vmatprep.subr.mxu0 0.0
  %354 = vmatpush2.msra.mxu0 0.0
  %355 = vmatprep.subr.mxu0 0.0
  %356 = vmatpush2.msra.mxu0 0.0
  %357 = vmatprep.subr.mxu0 0.0
  %358 = vmatpush2.msra.mxu0 0.0
  %359 = vmatprep.subr.mxu0 0.0
  %360 = vmatpush2.msra.mxu0 0.0
  %361 = vmatprep.subr.mxu0 0.0
  %362 = vmatpush2.msra.mxu0 0.0
  %363 = vmatprep.subr.mxu0 0.0
  %364 = vmatpush2.msra.mxu0 0.0
  %365 = vmatprep.subr.mxu0 0.0
  %366 = vmatpush2.msra.mxu0 0.0
  %367 = vmatprep.subr.mxu0 0.0
  %368 = vmatpush2.msra.mxu0 0.0
  %369 = vmatprep.subr.mxu0 0.0
  %370 = vmatpush2.msra.mxu0 0.0
  %371 = vmatprep.subr.mxu0 0.0
  %372 = vmatpush2.msra.mxu0 0.0
  %373 = vmatprep.subr.mxu0 0.0
  %374 = vmatpush2.msra.mxu0 0.0
  %375 = vmatprep.subr.mxu0 0.0
  %376 = vmatpush2.msra.mxu0 0.0
  %377 = vmatprep.subr.mxu0 0.0
  %378 = vmatpush2.msra.mxu0 0.0
  %379 = vmatprep.mubr.f32.mxu0 0.0
  %380 = vmatmul.mubr.f32.gmra.mxu0 %v26
  %v381 = vpop.f32.mrf.mxu0
  %v382 = vadd.f32 %v131, %v381
  %v383 = vpop.f32.mrf.mxu0
  %384 = vmatprep.mubr.f32.mxu0 0.0
  %385 = vmatmul.mubr.f32.gmra.mxu0 %v27
  %v386 = vpop.f32.mrf.mxu0
  %v387 = vadd.f32 %v131, %v386
  %v388 = vpop.f32.mrf.mxu0
  %389 = vmatprep.mubr.f32.mxu0 0.0
  %390 = vmatmul.mubr.f32.gmra.mxu0 %v28
  %v391 = vpop.f32.mrf.mxu0
  %v392 = vadd.f32 %v131, %v391
  %v393 = vpop.f32.mrf.mxu0
  %394 = vmatprep.mubr.f32.mxu0 0.0
  %395 = vmatmul.mubr.f32.gmra.mxu0 %v29
  %v396 = vpop.f32.mrf.mxu0
  %v397 = vadd.f32 %v131, %v396
  %v398 = vpop.f32.mrf.mxu0
  %399 = vdwg.mxu0
  %408 = vrot.lane.b32.xlu0 %v206, 112
  %v409 = vpop.permute.xlu0 %408
  %410 = vrot.lane.b32.xlu0 %v293, 112
  %v411 = vpop.permute.xlu0 %410
  %412 = vrot.lane.b32.xlu0 %v212, 112
  %v413 = vpop.permute.xlu0 %412
  %414 = vrot.lane.b32.xlu0 %v299, 112
  %v415 = vpop.permute.xlu0 %414
  %416 = vrot.lane.b32.xlu0 %v218, 112
  %v417 = vpop.permute.xlu0 %416
  %418 = vrot.lane.b32.xlu0 %v305, 112
  %v419 = vpop.permute.xlu0 %418
  %420 = vrot.lane.b32.xlu0 %v224, 112
  %v421 = vpop.permute.xlu0 %420
  %422 = vrot.lane.b32.xlu0 %v311, 112
  %v423 = vpop.permute.xlu0 %422
  %vm424 = vcmask 916480
  %v425 = vsel %vm424, %v409, %v411
  %v426 = vsel %vm424, %v413, %v415
  %v427 = vsel %vm424, %v417, %v419
  %v428 = vsel %vm424, %v421, %v423
  %v437 = vmax.f32 %v204, %v425
  %v438 = vmax.f32 %v206, %v411
  %v439 = vmax.f32 %v210, %v426
  %v440 = vmax.f32 %v212, %v415
  %v441 = vmax.f32 %v216, %v427
  %v442 = vmax.f32 %v218, %v419
  %v443 = vmax.f32 %v222, %v428
  %v444 = vmax.f32 %v224, %v423
  %449 = vrot.lane.b32.xlu0 %v293, 96
  %v450 = vpop.permute.xlu0 %449
  %451 = vrot.lane.b32.xlu0 %v295, 96
  %v452 = vpop.permute.xlu0 %451
  %453 = vrot.lane.b32.xlu0 %v299, 96
  %v454 = vpop.permute.xlu0 %453
  %455 = vrot.lane.b32.xlu0 %v301, 96
  %v456 = vpop.permute.xlu0 %455
  %457 = vrot.lane.b32.xlu0 %v305, 96
  %v458 = vpop.permute.xlu0 %457
  %459 = vrot.lane.b32.xlu0 %v307, 96
  %v460 = vpop.permute.xlu0 %459
  %461 = vrot.lane.b32.xlu0 %v311, 96
  %v462 = vpop.permute.xlu0 %461
  %463 = vrot.lane.b32.xlu0 %v313, 96
  %v464 = vpop.permute.xlu0 %463
  %vm465 = vcmask 785408
  %v466 = vsel %vm465, %v450, %v452
  %v467 = vsel %vm465, %v454, %v456
  %v468 = vsel %vm465, %v458, %v460
  %v469 = vsel %vm465, %v462, %v464
  %v478 = vmax.f32 %v437, %v466
  %v479 = vmax.f32 %v438, %v452
  %v480 = vmax.f32 %v439, %v467
  %v481 = vmax.f32 %v440, %v456
  %v482 = vmax.f32 %v441, %v468
  %v483 = vmax.f32 %v442, %v460
  %v484 = vmax.f32 %v443, %v469
  %v485 = vmax.f32 %v444, %v464
  %490 = vrot.lane.b32.xlu0 %v295, 80
  %v491 = vpop.permute.xlu0 %490
  %492 = vrot.lane.b32.xlu0 %v382, 80
  %v493 = vpop.permute.xlu0 %492
  %494 = vrot.lane.b32.xlu0 %v301, 80
  %v495 = vpop.permute.xlu0 %494
  %496 = vrot.lane.b32.xlu0 %v387, 80
  %v497 = vpop.permute.xlu0 %496
  %498 = vrot.lane.b32.xlu0 %v307, 80
  %v499 = vpop.permute.xlu0 %498
  %500 = vrot.lane.b32.xlu0 %v392, 80
  %v501 = vpop.permute.xlu0 %500
  %502 = vrot.lane.b32.xlu0 %v313, 80
  %v503 = vpop.permute.xlu0 %502
  %504 = vrot.lane.b32.xlu0 %v397, 80
  %v505 = vpop.permute.xlu0 %504
  %vm506 = vcmask 654336
  %v507 = vsel %vm506, %v491, %v493
  %v508 = vsel %vm506, %v495, %v497
  %v509 = vsel %vm506, %v499, %v501
  %v510 = vsel %vm506, %v503, %v505
  %v519 = vmax.f32 %v478, %v507
  %v520 = vmax.f32 %v479, %v493
  %v521 = vmax.f32 %v480, %v508
  %v522 = vmax.f32 %v481, %v497
  %v523 = vmax.f32 %v482, %v509
  %v524 = vmax.f32 %v483, %v501
  %v525 = vmax.f32 %v484, %v510
  %v526 = vmax.f32 %v485, %v505
  %528 = vrot.lane.b32.xlu0 %v520, 113
  %v529 = vpop.permute.xlu0 %528
  %s530 = vtos %v529
  %v531 = vstv %s530
  %vm533 = vcmp.eq.f32.partialorder %v519, %v531
  %vm534 = vcmp.eq.f32.partialorder %v520, %v531
  %vm535 = vcmp.eq.f32.partialorder %v521, %v531
  %vm536 = vcmp.eq.f32.partialorder %v522, %v531
  %vm537 = vcmp.eq.f32.partialorder %v523, %v531
  %vm538 = vcmp.eq.f32.partialorder %v524, %v531
  %vm539 = vcmp.eq.f32.partialorder %v525, %v531
  %vm540 = vcmp.eq.f32.partialorder %v526, %v531
  %v541 = vsel %vm533, 1, 0
  %v542 = vsel %vm534, 1, 0
  %v543 = vsel %vm535, 1, 0
  %v544 = vsel %vm536, 1, 0
  %v545 = vsel %vm537, 1, 0
  %v546 = vsel %vm538, 1, 0
  %v547 = vsel %vm539, 1, 0
  %v548 = vsel %vm540, 1, 0
  %v549 = vcvt.s32.f32 %v541
  %v550 = vcvt.s32.f32 %v542
  %v551 = vcvt.s32.f32 %v543
  %v552 = vcvt.s32.f32 %v544
  %v553 = vcvt.s32.f32 %v545
  %v554 = vcvt.s32.f32 %v546
  %v555 = vcvt.s32.f32 %v547
  %v556 = vcvt.s32.f32 %v548
  %vm557 = vcmask 130048
  %v558 = vsel %vm557, %v550, 0.0
  %v559 = vadd.f32 %v549, %v558
  %v560 = vadd.f32 %v559, %v551
  %v561 = vsel %vm557, %v552, 0.0
  %v562 = vadd.f32 %v560, %v561
  %v563 = vadd.f32 %v562, %v553
  %v564 = vsel %vm557, %v554, 0.0
  %v565 = vadd.f32 %v563, %v564
  %v566 = vadd.f32 %v565, %v555
  %v567 = vsel %vm557, %v556, 0.0
  %v568 = vadd.f32 %v566, %v567
  %569 = vadd.xlane.f32.xlu0 %v568
  %v570 = vpop.xlane.xlu0 %569
  %v571 = vrot.slane %v570, 4
  %v572 = vadd.f32 %v570, %v571
  %v573 = vrot.slane %v572, 2
  %v574 = vadd.f32 %v572, %v573
  %v575 = vrot.slane %v574, 1
  %v576 = vadd.f32 %v574, %v575
  %s577 = vtos %v576
  %v578 = vstv %s577
  %vm579 = vcmp.gt.f32.partialorder %v578, 16.0
  %v580 = vsel %vm579, 1, 0
  %vm581 = vcmp.eq.s32.totalorder %v580, 1
  %vm582 = vmand %vm533, %vm581
  %vm583 = vmand %vm534, %vm581
  %vm584 = vmand %vm535, %vm581
  %vm585 = vmand %vm536, %vm581
  %vm586 = vmand %vm537, %vm581
  %vm587 = vmand %vm538, %vm581
  %vm588 = vmand %vm539, %vm581
  %vm589 = vmand %vm540, %vm581
  %v590 = vsel %vm582, 0.0, %v519
  %v591 = vsel %vm583, 0.0, %v520
  %v592 = vsel %vm584, 0.0, %v521
  %v593 = vsel %vm585, 0.0, %v522
  %v594 = vsel %vm586, 0.0, %v523
  %v595 = vsel %vm587, 0.0, %v524
  %v596 = vsel %vm588, 0.0, %v525
  %v597 = vsel %vm589, 0.0, %v526
  %v598 = vld [vmem:[%s3] sm:$0xff]
  %v599 = vld [vmem:[%s3 + $0x8] sm:$0xff]
  %v600 = vld [vmem:[%s3 + $0x10] sm:$0xff]
  %v601 = vld [vmem:[%s3 + $0x18] sm:$0xff]
  %v602 = vld [vmem:[%s3 + $0x20] sm:$0xff]
  %v603 = vld [vmem:[%s3 + $0x28] sm:$0xff]
  %v604 = vld [vmem:[%s3 + $0x30] sm:$0xff]
  %v605 = vld [vmem:[%s3 + $0x38] sm:$0xff]
  %v606 = vld [vmem:[%s3 + $0x40] sm:$0xff]
  %v607 = vld [vmem:[%s3 + $0x48] sm:$0xff]
  %v608 = vld [vmem:[%s3 + $0x50] sm:$0xff]
  %v609 = vld [vmem:[%s3 + $0x58] sm:$0xff]
  %v610 = vld [vmem:[%s3 + $0x60] sm:$0xff]
  %v611 = vld [vmem:[%s3 + $0x68] sm:$0xff]
  %v612 = vld [vmem:[%s3 + $0x70] sm:$0xff]
  %v613 = vld [vmem:[%s3 + $0x78] sm:$0xff]
  %v614 = vld [vmem:[%s3 + $0x80] sm:$0xff]
  %v615 = vld [vmem:[%s3 + $0x88] sm:$0xff]
  %v616 = vld [vmem:[%s4] sm:$0x1]
  %v618 = vlaneseq
  %v619 = vshrl.u32 %v618, 7
  %v620 = vsub.s32 0, %v619
  %v621 = vrot.slane %v616, %v620
  %v624 = vsel %vm557, %v591, 0
  %v627 = vsel %vm557, %v593, 0
  %v630 = vsel %vm557, %v595, 0
  %v633 = vsel %vm557, %v597, 0
  %635 = vmatprep.subr.mxu0 0.0
  %636 = vmatpush1.msra.mxu0 %v613
  %637 = vmatprep.subr.mxu0 0.0
  %638 = vmatpush1.msra.mxu0 %v612
  %639 = vmatprep.subr.mxu0 0.0
  %640 = vmatpush1.msra.mxu0 %v611
  %641 = vmatprep.subr.mxu0 0.0
  %642 = vmatpush1.msra.mxu0 %v610
  %643 = vmatprep.subr.mxu0 0.0
  %644 = vmatpush1.msra.mxu0 %v609
  %645 = vmatprep.subr.mxu0 0.0
  %646 = vmatpush1.msra.mxu0 %v608
  %647 = vmatprep.subr.mxu0 0.0
  %648 = vmatpush1.msra.mxu0 %v607
  %649 = vmatprep.subr.mxu0 0.0
  %650 = vmatpush1.msra.mxu0 %v606
  %651 = vmatprep.subr.mxu0 0.0
  %652 = vmatpush1.msra.mxu0 %v605
  %653 = vmatprep.subr.mxu0 0.0
  %654 = vmatpush1.msra.mxu0 %v604
  %655 = vmatprep.subr.mxu0 0.0
  %656 = vmatpush1.msra.mxu0 %v603
  %657 = vmatprep.subr.mxu0 0.0
  %658 = vmatpush1.msra.mxu0 %v602
  %659 = vmatprep.subr.mxu0 0.0
  %660 = vmatpush1.msra.mxu0 %v601
  %661 = vmatprep.subr.mxu0 0.0
  %662 = vmatpush1.msra.mxu0 %v600
  %663 = vmatprep.subr.mxu0 0.0
  %664 = vmatpush1.msra.mxu0 %v599
  %665 = vmatprep.subr.mxu0 0.0
  %666 = vmatpush1.msra.mxu0 %v598
  %667 = vmatprep.subr.mxu0 0.0
  %668 = vmatpush2.msra.mxu0 0.0
  %669 = vmatprep.subr.mxu0 0.0
  %670 = vmatpush2.msra.mxu0 0.0
  %671 = vmatprep.subr.mxu0 0.0
  %672 = vmatpush2.msra.mxu0 0.0
  %673 = vmatprep.subr.mxu0 0.0
  %674 = vmatpush2.msra.mxu0 0.0
  %675 = vmatprep.subr.mxu0 0.0
  %676 = vmatpush2.msra.mxu0 0.0
  %677 = vmatprep.subr.mxu0 0.0
  %678 = vmatpush2.msra.mxu0 0.0
  %679 = vmatprep.subr.mxu0 0.0
  %680 = vmatpush2.msra.mxu0 0.0
  %681 = vmatprep.subr.mxu0 0.0
  %682 = vmatpush2.msra.mxu0 0.0
  %683 = vmatprep.subr.mxu0 0.0
  %684 = vmatpush2.msra.mxu0 0.0
  %685 = vmatprep.subr.mxu0 0.0
  %686 = vmatpush2.msra.mxu0 0.0
  %687 = vmatprep.subr.mxu0 0.0
  %688 = vmatpush2.msra.mxu0 0.0
  %689 = vmatprep.subr.mxu0 0.0
  %690 = vmatpush2.msra.mxu0 0.0
  %691 = vmatprep.subr.mxu0 0.0
  %692 = vmatpush2.msra.mxu0 0.0
  %693 = vmatprep.subr.mxu0 0.0
  %694 = vmatpush2.msra.mxu0 0.0
  %695 = vmatprep.subr.mxu0 0.0
  %696 = vmatpush2.msra.mxu0 %v615
  %697 = vmatprep.subr.mxu0 0.0
  %698 = vmatpush2.msra.mxu0 %v614
  %699 = vmatprep.mubr.f32.mxu0 %v624
  %700 = vmatmul.mubr.f32.gmra.mxu0 %v590
  %v701 = vpop.f32.mrf.mxu0
  %v702 = vadd.f32 %v621, %v701
  %v703 = vpop.f32.mrf.mxu0
  %704 = vmatprep.mubr.f32.mxu0 %v627
  %705 = vmatmul.mubr.f32.gmra.mxu0 %v592
  %v706 = vpop.f32.mrf.mxu0
  %v707 = vadd.f32 %v621, %v706
  %v708 = vpop.f32.mrf.mxu0
  %709 = vmatprep.mubr.f32.mxu0 %v630
  %710 = vmatmul.mubr.f32.gmra.mxu0 %v594
  %v711 = vpop.f32.mrf.mxu0
  %v712 = vadd.f32 %v621, %v711
  %v713 = vpop.f32.mrf.mxu0
  %714 = vmatprep.mubr.f32.mxu0 %v633
  %715 = vmatmul.mubr.f32.gmra.mxu0 %v596
  %v716 = vpop.f32.mrf.mxu0
  %v717 = vadd.f32 %v621, %v716
  %v718 = vpop.f32.mrf.mxu0
  %719 = vdwg.mxu0
  %vm720 = vcmp.ge.f32.partialorder %v702, 0.0
  %vm721 = vcmp.ge.f32.partialorder %v707, 0.0
  %vm722 = vcmp.ge.f32.partialorder %v712, 0.0
  %vm723 = vcmp.ge.f32.partialorder %v717, 0.0
  %v724 = vmul.f32 %v702, 0.2
  %v725 = vmul.f32 %v707, 0.2
  %v726 = vmul.f32 %v712, 0.2
  %v727 = vmul.f32 %v717, 0.2
  %v728 = vsel %vm720, %v702, %v724
  %v729 = vsel %vm721, %v707, %v725
  %v730 = vsel %vm722, %v712, %v726
  %v731 = vsel %vm723, %v717, %v727
  %v732 = vld [vmem:[%s5] sm:$0xff]
  %v733 = vld [vmem:[%s5 + $0x8] sm:$0xff]
  %v734 = vld [vmem:[%s5 + $0x10] sm:$0xff]
  %v735 = vld [vmem:[%s5 + $0x18] sm:$0xff]
  %v736 = vld [vmem:[%s6] sm:$0x1]
  %v738 = vlaneseq
  %v739 = vshrl.u32 %v738, 7
  %v740 = vsub.s32 0, %v739
  %v741 = vrot.slane %v736, %v740
  %vm743 = vcmask 261120
  %v745 = vsel %vm743, %v728, 0
  %v748 = vsel %vm743, %v729, 0
  %v751 = vsel %vm743, %v730, 0
  %v754 = vsel %vm743, %v731, 0
  %756 = vmatprep.subr.mxu0 0.0
  %757 = vmatpush1.msra.mxu0 0.0
  %758 = vmatprep.subr.mxu0 0.0
  %759 = vmatpush1.msra.mxu0 0.0
  %760 = vmatprep.subr.mxu0 0.0
  %761 = vmatpush1.msra.mxu0 0.0
  %762 = vmatprep.subr.mxu0 0.0
  %763 = vmatpush1.msra.mxu0 0.0
  %764 = vmatprep.subr.mxu0 0.0
  %765 = vmatpush1.msra.mxu0 0.0
  %766 = vmatprep.subr.mxu0 0.0
  %767 = vmatpush1.msra.mxu0 0.0
  %768 = vmatprep.subr.mxu0 0.0
  %769 = vmatpush1.msra.mxu0 0.0
  %770 = vmatprep.subr.mxu0 0.0
  %771 = vmatpush1.msra.mxu0 0.0
  %772 = vmatprep.subr.mxu0 0.0
  %773 = vmatpush1.msra.mxu0 0.0
  %774 = vmatprep.subr.mxu0 0.0
  %775 = vmatpush1.msra.mxu0 0.0
  %776 = vmatprep.subr.mxu0 0.0
  %777 = vmatpush1.msra.mxu0 0.0
  %778 = vmatprep.subr.mxu0 0.0
  %779 = vmatpush1.msra.mxu0 0.0
  %780 = vmatprep.subr.mxu0 0.0
  %781 = vmatpush1.msra.mxu0 %v735
  %782 = vmatprep.subr.mxu0 0.0
  %783 = vmatpush1.msra.mxu0 %v734
  %784 = vmatprep.subr.mxu0 0.0
  %785 = vmatpush1.msra.mxu0 %v733
  %786 = vmatprep.subr.mxu0 0.0
  %787 = vmatpush1.msra.mxu0 %v732
  %788 = vmatprep.subr.mxu0 0.0
  %789 = vmatpush2.msra.mxu0 0.0
  %790 = vmatprep.subr.mxu0 0.0
  %791 = vmatpush2.msra.mxu0 0.0
  %792 = vmatprep.subr.mxu0 0.0
  %793 = vmatpush2.msra.mxu0 0.0
  %794 = vmatprep.subr.mxu0 0.0
  %795 = vmatpush2.msra.mxu0 0.0
  %796 = vmatprep.subr.mxu0 0.0
  %797 = vmatpush2.msra.mxu0 0.0
  %798 = vmatprep.subr.mxu0 0.0
  %799 = vmatpush2.msra.mxu0 0.0
  %800 = vmatprep.subr.mxu0 0.0
  %801 = vmatpush2.msra.mxu0 0.0
  %802 = vmatprep.subr.mxu0 0.0
  %803 = vmatpush2.msra.mxu0 0.0
  %804 = vmatprep.subr.mxu0 0.0
  %805 = vmatpush2.msra.mxu0 0.0
  %806 = vmatprep.subr.mxu0 0.0
  %807 = vmatpush2.msra.mxu0 0.0
  %808 = vmatprep.subr.mxu0 0.0
  %809 = vmatpush2.msra.mxu0 0.0
  %810 = vmatprep.subr.mxu0 0.0
  %811 = vmatpush2.msra.mxu0 0.0
  %812 = vmatprep.subr.mxu0 0.0
  %813 = vmatpush2.msra.mxu0 0.0
  %814 = vmatprep.subr.mxu0 0.0
  %815 = vmatpush2.msra.mxu0 0.0
  %816 = vmatprep.subr.mxu0 0.0
  %817 = vmatpush2.msra.mxu0 0.0
  %818 = vmatprep.subr.mxu0 0.0
  %819 = vmatpush2.msra.mxu0 0.0
  %820 = vmatprep.mubr.f32.mxu0 0.0
  %821 = vmatmul.mubr.f32.gmra.mxu0 %v745
  %v822 = vpop.f32.mrf.mxu0
  %v823 = vadd.f32 %v741, %v822
  %v824 = vpop.f32.mrf.mxu0
  %825 = vmatprep.mubr.f32.mxu0 0.0
  %826 = vmatmul.mubr.f32.gmra.mxu0 %v748
  %v827 = vpop.f32.mrf.mxu0
  %v828 = vadd.f32 %v741, %v827
  %v829 = vpop.f32.mrf.mxu0
  %830 = vmatprep.mubr.f32.mxu0 0.0
  %831 = vmatmul.mubr.f32.gmra.mxu0 %v751
  %v832 = vpop.f32.mrf.mxu0
  %v833 = vadd.f32 %v741, %v832
  %v834 = vpop.f32.mrf.mxu0
  %835 = vmatprep.mubr.f32.mxu0 0.0
  %836 = vmatmul.mubr.f32.gmra.mxu0 %v754
  %v837 = vpop.f32.mrf.mxu0
  %v838 = vadd.f32 %v741, %v837
  %v839 = vpop.f32.mrf.mxu0
  %840 = vdwg.mxu0
  %v841 = vmul.f32 %v823, %v823
  %v842 = vmul.f32 %v828, %v828
  %v843 = vmul.f32 %v833, %v833
  %v844 = vmul.f32 %v838, %v838
  %vm845 = vcmask 64512
  %v846 = vsel %vm845, %v841, 0.0
  %847 = vadd.xlane.f32.xlu0 %v846
  %v848 = vpop.xlane.xlu0 %847
  %v849 = vsel %vm845, %v842, 0.0
  %850 = vadd.xlane.f32.xlu0 %v849
  %v851 = vpop.xlane.xlu0 %850
  %v852 = vsel %vm845, %v843, 0.0
  %853 = vadd.xlane.f32.xlu0 %v852
  %v854 = vpop.xlane.xlu0 %853
  %v855 = vsel %vm845, %v844, 0.0
  %856 = vadd.xlane.f32.xlu0 %v855
  %v857 = vpop.xlane.xlu0 %856
  %v858 = vmax.f32 %v848, 1e-24
  %v859 = vmax.f32 %v851, 1e-24
  %v860 = vmax.f32 %v854, 1e-24
  %v861 = vmax.f32 %v857, 1e-24
  %v862 = vrsqrt.pop %v858
  %v863 = vrsqrt.pop %v859
  %v864 = vrsqrt.pop %v860
  %v865 = vrsqrt.pop %v861
  %v866 = vmul.f32 %v823, %v862
  %v867 = vmul.f32 %v828, %v863
  %v868 = vmul.f32 %v833, %v864
  %v869 = vmul.f32 %v838, %v865
  %v871 = vsel %vm845, %v866, 0
  %v874 = vsel %vm845, %v867, 0
  %v877 = vsel %vm845, %v868, 0
  %v880 = vsel %vm845, %v869, 0
  %882 = vmatprep.subr.mxu0 0.0
  %883 = vmatpush1.xpose.msra.mxu0 0.0
  %884 = vmatprep.subr.mxu0 0.0
  %885 = vmatpush1.xpose.msra.mxu0 0.0
  %886 = vmatprep.subr.mxu0 0.0
  %887 = vmatpush1.xpose.msra.mxu0 0.0
  %888 = vmatprep.subr.mxu0 0.0
  %889 = vmatpush1.xpose.msra.mxu0 0.0
  %890 = vmatprep.subr.mxu0 0.0
  %891 = vmatpush1.xpose.msra.mxu0 0.0
  %892 = vmatprep.subr.mxu0 0.0
  %893 = vmatpush1.xpose.msra.mxu0 0.0
  %894 = vmatprep.subr.mxu0 0.0
  %895 = vmatpush1.xpose.msra.mxu0 0.0
  %896 = vmatprep.subr.mxu0 0.0
  %897 = vmatpush1.xpose.msra.mxu0 0.0
  %898 = vmatprep.subr.mxu0 0.0
  %899 = vmatpush1.xpose.msra.mxu0 0.0
  %900 = vmatprep.subr.mxu0 0.0
  %901 = vmatpush1.xpose.msra.mxu0 0.0
  %902 = vmatprep.subr.mxu0 0.0
  %903 = vmatpush1.xpose.msra.mxu0 0.0
  %904 = vmatprep.subr.mxu0 0.0
  %905 = vmatpush1.xpose.msra.mxu0 0.0
  %906 = vmatprep.subr.mxu0 0.0
  %907 = vmatpush1.xpose.msra.mxu0 %v880
  %908 = vmatprep.subr.mxu0 0.0
  %909 = vmatpush1.xpose.msra.mxu0 %v877
  %910 = vmatprep.subr.mxu0 0.0
  %911 = vmatpush1.xpose.msra.mxu0 %v874
  %912 = vmatprep.subr.mxu0 0.0
  %913 = vmatpush1.xpose.msra.mxu0 %v871
  %914 = vmatprep.subr.mxu0 0.0
  %915 = vmatpush2.xpose.msra.mxu0 0.0
  %916 = vmatprep.subr.mxu0 0.0
  %917 = vmatpush2.xpose.msra.mxu0 0.0
  %918 = vmatprep.subr.mxu0 0.0
  %919 = vmatpush2.xpose.msra.mxu0 0.0
  %920 = vmatprep.subr.mxu0 0.0
  %921 = vmatpush2.xpose.msra.mxu0 0.0
  %922 = vmatprep.subr.mxu0 0.0
  %923 = vmatpush2.xpose.msra.mxu0 0.0
  %924 = vmatprep.subr.mxu0 0.0
  %925 = vmatpush2.xpose.msra.mxu0 0.0
  %926 = vmatprep.subr.mxu0 0.0
  %927 = vmatpush2.xpose.msra.mxu0 0.0
  %928 = vmatprep.subr.mxu0 0.0
  %929 = vmatpush2.xpose.msra.mxu0 0.0
  %930 = vmatprep.subr.mxu0 0.0
  %931 = vmatpush2.xpose.msra.mxu0 0.0
  %932 = vmatprep.subr.mxu0 0.0
  %933 = vmatpush2.xpose.msra.mxu0 0.0
  %934 = vmatprep.subr.mxu0 0.0
  %935 = vmatpush2.xpose.msra.mxu0 0.0
  %936 = vmatprep.subr.mxu0 0.0
  %937 = vmatpush2.xpose.msra.mxu0 0.0
  %938 = vmatprep.subr.mxu0 0.0
  %939 = vmatpush2.xpose.msra.mxu0 0.0
  %940 = vmatprep.subr.mxu0 0.0
  %941 = vmatpush2.xpose.msra.mxu0 0.0
  %942 = vmatprep.subr.mxu0 0.0
  %943 = vmatpush2.xpose.msra.mxu0 0.0
  %944 = vmatprep.subr.mxu0 0.0
  %945 = vmatpush2.xpose.msra.mxu0 0.0
  %946 = vmatprep.mubr.f32.mxu0 0.0
  %947 = vmatmul.mubr.f32.gmra.mxu0 %v871
  %v948 = vpop.f32.mrf.mxu0
  %v949 = vadd.f32 0.0, %v948
  %v950 = vpop.f32.mrf.mxu0
  %951 = vmatprep.mubr.f32.mxu0 0.0
  %952 = vmatmul.mubr.f32.gmra.mxu0 %v874
  %v953 = vpop.f32.mrf.mxu0
  %v954 = vadd.f32 0.0, %v953
  %v955 = vpop.f32.mrf.mxu0
  %956 = vmatprep.mubr.f32.mxu0 0.0
  %957 = vmatmul.mubr.f32.gmra.mxu0 %v877
  %v958 = vpop.f32.mrf.mxu0
  %v959 = vadd.f32 0.0, %v958
  %v960 = vpop.f32.mrf.mxu0
  %961 = vmatprep.mubr.f32.mxu0 0.0
  %962 = vmatmul.mubr.f32.gmra.mxu0 %v880
  %v963 = vpop.f32.mrf.mxu0
  %v964 = vadd.f32 0.0, %v963
  %v965 = vpop.f32.mrf.mxu0
  %966 = vdwg.mxu0
  %967 = vst.msk [vmem:[%s7] sm:$0xff] %vm743, %v949
  %968 = vst.msk [vmem:[%s7 + $0x8] sm:$0xff] %vm743, %v954
  %969 = vst.msk [vmem:[%s7 + $0x10] sm:$0xff] %vm743, %v959
  %970 = vst.msk [vmem:[%s7 + $0x18] sm:$0xff] %vm743, %v964
  // Predicated region
  $region30: #{seqence_model_forward.1} parent=0 // pred_check
    _
  $region31: #{seqence_model_forward.1} parent=0 // pred_check_branch
    %972 = sbr.rel (0) target = $region33
  $region32: #{seqence_model_forward.1} parent=0 // pred_region
    _
  $region33: #{seqence_model_forward.1} parent=0 // pred_fallthru
    _
  // Predicated region
  $region34: #{seqence_model_forward.1} parent=0 // pred_check
    _
  $region35: #{seqence_model_forward.1} parent=0 // pred_check_branch
    %974 = sbr.rel (0) target = $region37
  $region36: #{seqence_model_forward.1} parent=0 // pred_region
    _
  $region37: #{seqence_model_forward.1} parent=0 // pred_fallthru
    _

</llo_original>
